<compile_context>
chip_gen: v5e
topology: v5e:2x2
jax: 0.10.0
libtpu: 0.0.40
codegen_flags: <defaults>
</compile_context>

<pallas_src>
import jax
import jax.numpy as jnp
from jax.experimental import pallas as pl
from jax.experimental.pallas import tpu as pltpu

_LANE = 128
_SUBLANE = 8
_TM_MAX = 512            # batch-tile cap
_TK_BLOCK = 512          # K tile used when K-tiling kicks in
_K_PREPAD_THRESHOLD = 4096


def _round_up(a, m):
    return (a + m - 1) // m * m


def _vmem_ceiling_bytes():
    """Per-generation-safe VMEM ceiling: physical capacity minus headroom."""
    cap = 64 * 1024 * 1024              # v7x per-TensorCore VMEM (smallest gen)
    try:
        cap = int(pltpu.get_tpu_info().vmem_capacity_bytes)
    except Exception:
        pass
    return (cap * 3) // 4


def prepare_linear_params(weight, bias, *, param_dtype=None):
    """One-time (cacheable) preprocessing of torch.nn.Linear parameters.

    Hoisted out of the per-call path: the transpose/pad is an un-hidden HBM
    read+write of the full weight, which roughly doubles HBM traffic for a
    weight-bandwidth-bound Linear if done per forward.

      * transpose (Out, In) -> (In, Out) so the MXU consumes it directly
      * pad Out to a multiple of 128 (lane-dense output -> unmasked vst)
      * pad In to a multiple of _TK_BLOCK only when In is large enough that
        the forward will K-tile
      * optional weight downcast (e.g. jnp.bfloat16 on v5e halves weight HBM
        bytes); the kernel still accumulates in f32.

    Returns (w_t, b_row, out_features).
    """
    out_features, in_features = weight.shape
    out_p = _round_up(out_features, _LANE)
    in_p = (_round_up(in_features, _TK_BLOCK)
            if in_features > _K_PREPAD_THRESHOLD else in_features)
    w_t = jnp.pad(weight.T, ((0, in_p - in_features), (0, out_p - out_features)))
    if param_dtype is not None:
        w_t = w_t.astype(param_dtype)
    b_row = jnp.pad(bias.reshape(1, out_features),
                    ((0, 0), (0, out_p - out_features))).astype(jnp.float32)
    return w_t, b_row, out_features


def _linear_kernel(x_ref, w_ref, b_ref, o_ref, acc_ref):
    # x: (TM, TK), w: (TK, Out_p) pre-transposed, b: (1, Out_p), o: (TM, Out_p)
    k = pl.program_id(1)

    @pl.when(k == 0)
    def _():
        acc_ref[...] = jnp.zeros_like(acc_ref)

    acc_ref[...] += jnp.dot(x_ref[...], w_ref[...],
                            preferred_element_type=jnp.float32)

    @pl.when(k == pl.num_programs(1) - 1)
    def _():
        o_ref[...] = (acc_ref[...] + b_ref[...]).astype(o_ref.dtype)


def _choose_tm(batch):
    """Batch tile: multiple of 8, low pad waste, and >=2 blocks once the batch
    is large enough that splitting matters (keeps both v7x TensorCores busy)."""
    b8 = _round_up(batch, _SUBLANE)
    if b8 <= 256:
        return b8
    if b8 <= 2 * _TM_MAX:
        return _round_up(b8 // 2, _SUBLANE)        # exactly 2 blocks, minimal pad
    for cand in (_TM_MAX, 256, 128):               # 256-multiples preferred (v6e/v7x MXU)
        if _round_up(b8, cand) - b8 <= b8 // 8:    # keep pad waste <= ~12.5%
            return cand
    return 128


def linear_forward(x, w_t, b_row, out_features=None):
    """y = x @ weight.T + bias, with (w_t, b_row) from prepare_linear_params."""
    batch, in_features = x.shape
    in_p, out_p = w_t.shape
    if out_features is None:
        out_features = out_p

    x_isz = jnp.dtype(x.dtype).itemsize
    w_isz = jnp.dtype(w_t.dtype).itemsize

    tm = _choose_tm(batch)
    b_p = _round_up(batch, tm)
    budget = _vmem_ceiling_bytes()

    def plan_bytes(tm_, tk_, w_bufs_):
        return (2 * tm_ * tk_ * x_isz            # x tiles (double-buffered)
                + w_bufs_ * tk_ * out_p * w_isz  # weight tiles
                + 2 * out_p * 4                  # bias tiles (tiny)
                + 2 * tm_ * out_p * x_isz        # output tiles
                + tm_ * out_p * 4)               # f32 accumulator scratch

    # Plan A: full K resident, weight double-buffered (default pipelining).
    tk, w_bufs = in_p, 2
    if plan_bytes(tm, tk, w_bufs) > budget:
        # Plan B: single-buffer the resident weight — its index_map is
        # constant, so double-buffering only doubles its VMEM footprint.
        w_bufs = 1
    if plan_bytes(tm, tk, w_bufs) > budget and in_p % _TK_BLOCK == 0:
        # Plan C: K-tiled grid; the f32 scratch carries the partial sum.
        tk, w_bufs = _TK_BLOCK, 2
    while plan_bytes(tm, tk, w_bufs) > budget and tm > _SUBLANE:
        # Plan D: shrink the batch tile.
        tm = max(_SUBLANE, _round_up(tm // 2, _SUBLANE))
        b_p = _round_up(batch, tm)
    # TODO(synk): add an N (Out) grid axis (TN multiple of 256) for the case
    # where a single (tk, out_p) weight block alone exceeds the VMEM budget.

    nm, nk = b_p // tm, in_p // tk

    # Gated activation pad: only when the batch doesn't tile evenly or the
    # weight was K-pre-padded. Zero K columns contribute 0 to the dot.
    if b_p != batch or in_p != in_features:
        x_in = jnp.pad(x, ((0, b_p - batch), (0, in_p - in_features)))
    else:
        x_in = x

    w_spec_kwargs = {}
    if w_bufs == 1:
        w_spec_kwargs["pipeline_mode"] = pl.Buffered(buffer_count=1)

    plan = plan_bytes(tm, tk, w_bufs)
    vmem_limit = int(min(budget, max(plan + plan // 4 + (2 << 20), 16 << 20)))

    out = pl.pallas_call(
        _linear_kernel,
        out_shape=jax.ShapeDtypeStruct((b_p, out_p), x.dtype),
        grid_spec=pltpu.PrefetchScalarGridSpec(
            num_scalar_prefetch=0,
            grid=(nm, nk),
            in_specs=[
                pl.BlockSpec((tm, tk), lambda i, k: (i, k)),          # x, streamed
                pl.BlockSpec((tk, out_p), lambda i, k: (k, 0),        # weight
                             **w_spec_kwargs),
                pl.BlockSpec((1, out_p), lambda i, k: (0, 0)),        # bias, resident
            ],
            out_specs=pl.BlockSpec((tm, out_p), lambda i, k: (i, 0)),
            scratch_shapes=[pltpu.VMEM((tm, out_p), jnp.float32)],
        ),
        compiler_params=pltpu.CompilerParams(
            dimension_semantics=("parallel", "arbitrary"),
            vmem_limit_bytes=vmem_limit,
        ),
        cost_estimate=pl.CostEstimate(
            flops=2 * b_p * in_p * out_p,
            transcendentals=0,
            bytes_accessed=(b_p * in_p * x_isz + in_p * out_p * w_isz
                            + out_p * 4 + b_p * out_p * x_isz),
        ),
    )(x_in, w_t, b_row)

    # Gated slice: skip the extra HBM copy when nothing was padded.
    if b_p != batch or out_p != out_features:
        out = out[:batch, :out_features]
    return out


if __name__ == "__main__":
    # Small shapes consistent with the module: x: (batch, input_size).
    batch, input_size, output_size = 8, 32, 16

    key = jax.random.PRNGKey(0)
    kx, kw, kb = jax.random.split(key, 3)

    # nn.Linear-style init: U(-1/sqrt(in), 1/sqrt(in)).
    bound = 1.0 / (input_size ** 0.5)
    weight = jax.random.uniform(kw, (output_size, input_size),
                                dtype=jnp.float32, minval=-bound, maxval=bound)
    bias = jax.random.uniform(kb, (output_size,),
                              dtype=jnp.float32, minval=-bound, maxval=bound)
    x = jax.random.normal(kx, (batch, input_size), dtype=jnp.float32)

    # One-time parameter prep (hoisted out of the per-call path / cacheable).
    w_t, b_row, out_features = prepare_linear_params(weight, bias)

    y = linear_forward(x, w_t, b_row, out_features)
    y = jax.block_until_ready(y)

    # Reference check in plain JAX.
    y_ref = x @ weight.T + bias
    assert y.shape == (batch, output_size)
    assert jnp.allclose(y, y_ref, atol=1e-5, rtol=1e-5)

    print("KERNEL_OK")
</pallas_src>

<mosaic_0001>
module attributes {stable_mosaic.version = 11 : i64} {
  func.func @_linear_kernel(%arg0: i32, %arg1: i32, %arg2: memref<8x32xf32, #tpu.memory_space<vmem>>, %arg3: memref<32x128xf32, #tpu.memory_space<vmem>>, %arg4: memref<1x128xf32, #tpu.memory_space<vmem>>, %arg5: memref<8x128xf32, #tpu.memory_space<vmem>>, %arg6: memref<8x128xf32, #tpu.memory_space<vmem>>) attributes {dimension_semantics = [#tpu.dimension_semantics<parallel>, #tpu.dimension_semantics<arbitrary>], iteration_bounds = array<i64: 1, 1>, scalar_prefetch = 0 : i64, scratch_operands = 1 : i64, tpu.core_type = #tpu.core_type<tc>, window_params = [{transform_indices = @transform_0, window_bounds = array<i64: 8, 32>}, {transform_indices = @transform_1, window_bounds = array<i64: 32, 128>}, {pipeline_mode = #tpu.pipeline_mode<synchronous>, transform_indices = @transform_2, window_bounds = array<i64: 1, 128>}, {transform_indices = @transform_3, window_bounds = array<i64: 8, 128>}]} {
    %c0_i32 = arith.constant 0 : i32
    %0 = arith.cmpi eq, %arg1, %c0_i32 : i32
    %1 = arith.extui %0 : i1 to i32
    %c0_i32_0 = arith.constant 0 : i32
    %2 = arith.cmpi ne, %1, %c0_i32_0 : i32
    scf.if %2 {
      %cst_10 = arith.constant 0.000000e+00 : f32
      %12 = vector.broadcast %cst_10 : f32 to vector<8x128xf32>
      %c0_11 = arith.constant 0 : index
      %c0_12 = arith.constant 0 : index
      %13 = vector.load %arg6[%c0_11, %c0_12] : memref<8x128xf32, #tpu.memory_space<vmem>>, vector<8x128xf32>
      tpu.vector_store %arg6[%c0_11, %c0_12], %12 {strides = array<i32>} : memref<8x128xf32, #tpu.memory_space<vmem>>, vector<8x128xf32>,
    } else {
    }
    %c0 = arith.constant 0 : index
    %c0_1 = arith.constant 0 : index
    %3 = vector.load %arg6[%c0, %c0_1] : memref<8x128xf32, #tpu.memory_space<vmem>>, vector<8x128xf32>
    %c0_2 = arith.constant 0 : index
    %c0_3 = arith.constant 0 : index
    %4 = vector.load %arg2[%c0_2, %c0_3] : memref<8x32xf32, #tpu.memory_space<vmem>>, vector<8x32xf32>
    %c0_4 = arith.constant 0 : index
    %c0_5 = arith.constant 0 : index
    %5 = vector.load %arg3[%c0_4, %c0_5] : memref<32x128xf32, #tpu.memory_space<vmem>>, vector<32x128xf32>
    %cst = arith.constant dense<0.000000e+00> : vector<8x128xf32>
    %6 = tpu.matmul %4, %5, %cst {dimension_numbers = #tpu.dot_dimension_numbers<[1], [0], [0], [1], [0, 0, 1, 1], [], []>} : vector<8x32xf32>, vector<32x128xf32>, vector<8x128xf32> -> vector<8x128xf32>
    %7 = arith.addf %3, %6 : vector<8x128xf32>
    %c0_6 = arith.constant 0 : index
    %c0_7 = arith.constant 0 : index
    %8 = vector.load %arg6[%c0_6, %c0_7] : memref<8x128xf32, #tpu.memory_space<vmem>>, vector<8x128xf32>
    tpu.vector_store %arg6[%c0_6, %c0_7], %7 {strides = array<i32>} : memref<8x128xf32, #tpu.memory_space<vmem>>, vector<8x128xf32>,
    %c0_i32_8 = arith.constant 0 : i32
    %9 = arith.cmpi eq, %arg1, %c0_i32_8 : i32
    %10 = arith.extui %9 : i1 to i32
    %c0_i32_9 = arith.constant 0 : i32
    %11 = arith.cmpi ne, %10, %c0_i32_9 : i32
    scf.if %11 {
      %c0_10 = arith.constant 0 : index
      %c0_11 = arith.constant 0 : index
      %12 = vector.load %arg6[%c0_10, %c0_11] : memref<8x128xf32, #tpu.memory_space<vmem>>, vector<8x128xf32>
      %c0_12 = arith.constant 0 : index
      %c0_13 = arith.constant 0 : index
      %13 = vector.load %arg4[%c0_12, %c0_13] : memref<1x128xf32, #tpu.memory_space<vmem>>, vector<1x128xf32>
      %14 = vector.broadcast %13 : vector<1x128xf32> to vector<8x128xf32>
      %15 = arith.addf %12, %14 : vector<8x128xf32>
      %c0_14 = arith.constant 0 : index
      %c0_15 = arith.constant 0 : index
      %16 = vector.load %arg5[%c0_14, %c0_15] : memref<8x128xf32, #tpu.memory_space<vmem>>, vector<8x128xf32>
      tpu.vector_store %arg5[%c0_14, %c0_15], %15 {strides = array<i32>} : memref<8x128xf32, #tpu.memory_space<vmem>>, vector<8x128xf32>,
    } else {
    }
    return
  }
  func.func @transform_0(%arg0: i32, %arg1: i32) -> (i32, i32) {
    %c0_i32 = arith.constant 0 : i32
    return %arg0, %arg1 : i32, i32
  }
  func.func @transform_1(%arg0: i32, %arg1: i32) -> (i32, i32) {
    %c0_i32 = arith.constant 0 : i32
    %c0_i32_0 = arith.constant 0 : i32
    return %arg1, %c0_i32 : i32, i32
  }
  func.func @transform_2(%arg0: i32, %arg1: i32) -> (i32, i32) {
    %c0_i32 = arith.constant 0 : i32
    %c0_i32_0 = arith.constant 0 : i32
    %c0_i32_1 = arith.constant 0 : i32
    return %c0_i32, %c0_i32_0 : i32, i32
  }
  func.func @transform_3(%arg0: i32, %arg1: i32) -> (i32, i32) {
    %c0_i32 = arith.constant 0 : i32
    %c0_i32_0 = arith.constant 0 : i32
    return %arg0, %c0_i32 : i32, i32
  }
}

</mosaic_0001>

<llo_original>
// kernel: tpu_custom_call.1
$region0: #{tpu_custom_call.1}
  #allocation0 [shape = 'u32[]', space=smem, size = 0x4, offset = 0x4, fixed_abs, tag = 'smem constant byte address 0x4 - core index']
  #allocation1 [shape = 'u32[72,128]{1,0:T(1,128)}', space=vmem, size = 0x9000, scoped, tag = 'internal scratch']
  #allocation2 [shape = 'f32[8,128]{1,0:T(8,128)}', space=vmem, size = 0x1000, scoped, tag = 'scratch operand']
  %s0 = inlined_call_operand.hbm [shape: f32[8,32], index: 0, kind: input, shape index: {}]
  %s1 = inlined_call_operand.hbm [shape: f32[32,128], index: 1, kind: input, shape index: {}]
  %s2 = inlined_call_operand.vmem [shape: f32[1,128], index: 2, kind: input, shape index: {}]
  %s3 = inlined_call_operand.hbm [shape: f32[8,128], index: 3, kind: output, shape index: {}]
  %s4 = sld [smem:[#allocation0]]
  $region38: #{tpu_custom_call.1} parent=0
    _
  %s6 = ssub.s32 1, %s4
  %s7 = scalar_select 0, %s6, %s4
  $region1: #{tpu_custom_call.1} parent=0
    #allocation3 [shape = 'u8[4096]{0}', space=vmem, size = 0x1000, scoped, tag = 'input window, operand 0, single buffered']
    #allocation4 [shape = 's32[1]{0}', space=sflag, size = 0x4, scoped, tag = 'scoped memory for tpu_custom_call.1']
    #allocation5 [shape = 's32[1]{0}', space=sflag, size = 0x4, scoped, tag = 'scoped memory for tpu_custom_call.1']
    #allocation6 [shape = 'u8[16384]{0}', space=vmem, size = 0x4000, scoped, tag = 'input window, operand 1, single buffered']
    #allocation7 [shape = 's32[1]{0}', space=sflag, size = 0x4, scoped, tag = 'scoped memory for tpu_custom_call.1']
    #allocation8 [shape = 'u8[4096]{0}', space=vmem, size = 0x1000, scoped, tag = 'output window, operand 0, single buffered']
    %8 = vsyncpa [#allocation4], 0
    %9 = vsyncpa [#allocation7], 0
    %10 = vsyncpa [#allocation5], 0
    // Predicated region
    $region2: #{tpu_custom_call.1} parent=1 // pred_check
      _
    $region3: #{tpu_custom_call.1} parent=1 // pred_check_branch
      %12 = sbr.rel (0) target = $region5
    $region4: #{tpu_custom_call.1} parent=1 // pred_region
      %14 = vsyncadd [#allocation4], 0
      %s16 = sshll.u32 %s0, 4
      %s17 = int_to_ptr.hbm [resolvable:$true] %s16
      %s18 = sshll.u32 [#allocation3], 4
      %s19 = int_to_ptr.vmem [resolvable:$true] %s18
      %21 = dma.hbm_to_vmem [thread:$0]  %s17, 128, %s19, [#allocation4]
    $region5: #{tpu_custom_call.1} parent=1 // pred_fallthru
      _
    // Predicated region
    $region6: #{tpu_custom_call.1} parent=1 // pred_check
      _
    $region7: #{tpu_custom_call.1} parent=1 // pred_check_branch
      %23 = sbr.rel (0) target = $region9
    $region8: #{tpu_custom_call.1} parent=1 // pred_region
      %25 = vsyncadd [#allocation7], 0
      %s26 = sshll.u32 %s1, 4
      %s27 = int_to_ptr.hbm [resolvable:$true] %s26
      %s28 = sshll.u32 [#allocation6], 4
      %s29 = int_to_ptr.vmem [resolvable:$true] %s28
      %34 = dma.hbm_to_vmem [thread:$0]  %s27, 512, %s29, [#allocation7], 128, 128, 8
    $region9: #{tpu_custom_call.1} parent=1 // pred_fallthru
      _
    // Predicated region
    $region10: #{tpu_custom_call.1} parent=1 // pred_check
      _
    $region11: #{tpu_custom_call.1} parent=1 // pred_check_branch
      %36 = sbr.rel (0) target = $region13
    $region12: #{tpu_custom_call.1} parent=1 // pred_region
      _
    $region13: #{tpu_custom_call.1} parent=1 // pred_fallthru
      _
    // Predicated region
    $region14: #{tpu_custom_call.1} parent=1 // pred_check
      _
    $region15: #{tpu_custom_call.1} parent=1 // pred_check_branch
      %38 = sbr.rel (0) target = $region17
    $region16: #{tpu_custom_call.1} parent=1 // pred_region
      %40 = dma.done [#allocation4], 128
    $region17: #{tpu_custom_call.1} parent=1 // pred_fallthru
      _
    // Predicated region
    $region18: #{tpu_custom_call.1} parent=1 // pred_check
      _
    $region19: #{tpu_custom_call.1} parent=1 // pred_check_branch
      %42 = sbr.rel (0) target = $region21
    $region20: #{tpu_custom_call.1} parent=1 // pred_region
      %44 = dma.done [#allocation7], 512
    $region21: #{tpu_custom_call.1} parent=1 // pred_fallthru
      _
    %p45 = scmp.eq.s32.totalorder 0, 0
    // Predicated region
    $region22: #{tpu_custom_call.1} parent=1 // pred_check
      %p46 = pneg %p45
    $region23: #{tpu_custom_call.1} parent=1 // pred_check_branch
      %48 = sbr.rel (%p46) target = $region25
    $region24: #{tpu_custom_call.1} parent=1 // pred_region
      %49 = vst [vmem:[#allocation2] sm:$0xff] 0.0
    $region25: #{tpu_custom_call.1} parent=1 // pred_fallthru
      _
    %v50 = vld [vmem:[#allocation2] sm:$0xff]
    %v51 = vld [vmem:[#allocation3] sm:$0xff]
    %v52 = vld [vmem:[#allocation6] sm:$0xff]
    %v53 = vld [vmem:[#allocation6 + $0x8] sm:$0xff]
    %v54 = vld [vmem:[#allocation6 + $0x10] sm:$0xff]
    %v55 = vld [vmem:[#allocation6 + $0x18] sm:$0xff]
    %vm56 = vcmask 261120
    %v58 = vsel %vm56, %v51, 0
    %60 = vmatpush.msra.mxu0 0.0
    %61 = vmatpush.msra.mxu0 0.0
    %62 = vmatpush.msra.mxu0 0.0
    %63 = vmatpush.msra.mxu0 0.0
    %64 = vmatpush.msra.mxu0 0.0
    %65 = vmatpush.msra.mxu0 0.0
    %66 = vmatpush.msra.mxu0 0.0
    %67 = vmatpush.msra.mxu0 0.0
    %68 = vmatpush.msra.mxu0 0.0
    %69 = vmatpush.msra.mxu0 0.0
    %70 = vmatpush.msra.mxu0 0.0
    %71 = vmatpush.msra.mxu0 0.0
    %72 = vmatpush.msra.mxu0 %v55
    %73 = vmatpush.msra.mxu0 %v54
    %74 = vmatpush.msra.mxu0 %v53
    %75 = vmatpush.msra.mxu0 %v52
    %76 = vmatmul.f32.gmra.mxu0 %v58
    %v77 = vpop.f32.mrf.mxu0
    %v78 = vadd.f32 0.0, %v77
    %79 = vdwg.mxu0
    %v80 = vadd.f32 %v50, %v78
    %81 = vst [vmem:[#allocation2] sm:$0xff] %v80
    // Predicated region
    $region26: #{tpu_custom_call.1} parent=1 // pred_check
      %p82 = pneg %p45
    $region27: #{tpu_custom_call.1} parent=1 // pred_check_branch
      %84 = sbr.rel (%p82) target = $region29
    $region28: #{tpu_custom_call.1} parent=1 // pred_region
      %v85 = vld [vmem:[#allocation2] sm:$0xff]
      %v86 = vld [vmem:[%s2] sm:$0x1]
      %v88 = vperm.slane %v86, 0
      %v90 = vadd.f32 %v85, %v88
      %91 = vst [vmem:[#allocation8] sm:$0xff] %v90
    $region29: #{tpu_custom_call.1} parent=1 // pred_fallthru
      _
    // Predicated region
    $region30: #{tpu_custom_call.1} parent=1 // pred_check
      _
    $region31: #{tpu_custom_call.1} parent=1 // pred_check_branch
      %93 = sbr.rel (0) target = $region33
    $region32: #{tpu_custom_call.1} parent=1 // pred_region
      %95 = vsyncadd [#allocation5], 0
      %s97 = sshll.u32 [#allocation8], 4
      %s98 = int_to_ptr.vmem [resolvable:$true] %s97
      %s99 = sshll.u32 %s3, 4
      %s100 = int_to_ptr.hbm [resolvable:$true] %s99
      %102 = dma.vmem_to_hbm [thread:$0]  %s98, 128, %s100, [#allocation5]
    $region33: #{tpu_custom_call.1} parent=1 // pred_fallthru
      _
    // Predicated region
    $region34: #{tpu_custom_call.1} parent=1 // pred_check
      _
    $region35: #{tpu_custom_call.1} parent=1 // pred_check_branch
      %104 = sbr.rel (0) target = $region37
    $region36: #{tpu_custom_call.1} parent=1 // pred_region
      %106 = dma.done [#allocation5], 128
    $region37: #{tpu_custom_call.1} parent=1 // pred_fallthru
      _
    %107 = vsyncpa [#allocation4], 1
    %108 = vsyncpa [#allocation7], 1
    %109 = vsyncpa [#allocation5], 1

</llo_original>
